<compile_context>
chip_gen: v6e
topology: v6e:2x2x1
jax: 0.10.0
libtpu: 0.0.40
codegen_flags: <defaults>
</compile_context>

<pallas_src>
import functools

import jax
import jax.numpy as jnp
from jax.experimental import pallas as pl
from jax.experimental.pallas import tpu as pltpu


_SLAB_ROWS = 256       # rows per in-kernel slab (bounds per-slab working set)
_MAX_TILE_ROWS = 2048  # packed rows per grid step (~1 MiB f32 blocks)


def _round_up(a, b):
    return ((a + b - 1) // b) * b


def _cdiv(a, b):
    return (a + b - 1) // b


def _cortical_kernel(x_ref, w_ref, b_ref, o_ref, *, num_layers):
    """One grid step: (tm, Kp) packed rows through num_layers x (matmul+bias+ReLU)."""
    w = w_ref[...]                      # (Kp, Kp) block-diag weight, VMEM-resident
    b = b_ref[0].astype(jnp.float32)    # scalar bias from SMEM

    tm = x_ref.shape[0]                 # static
    slab = min(_SLAB_ROWS, tm)          # static; tm is a multiple of slab
    n_slabs = tm // slab                # static, <= _MAX_TILE_ROWS // _SLAB_ROWS

    def layers(x):
        for _ in range(num_layers):     # static unroll; num_layers is small
            y = jnp.dot(x, w, preferred_element_type=jnp.float32) + b
            x = jnp.maximum(y, 0.0).astype(x_ref.dtype)   # bias+ReLU in f32
        return x

    # Static slab loop: slabs are independent (no carried value), slices are
    # static -> zero-cost ref views, and the scheduler sees the full tile.
    for s in range(n_slabs):
        rows = pl.ds(s * slab, slab)
        o_ref[rows, :] = layers(x_ref[rows, :]).astype(o_ref.dtype)


def cortical_column_forward(x, kernel, bias, *, num_layers=2, target_shape=None,
                            use_bf16=False):
    """JAX/Pallas equivalent of CorticalColumn.forward.

    x:       [B, C, H, W] float32, W must equal kernel_dim (after optional resize)
    kernel:  [K, K] float32
    bias:    [1]    float32
    use_bf16: store activations/weights in bf16 for HBM traffic (f32 accumulate).
    """
    if target_shape is not None:
        # TODO(synk): fuse the bilinear row-gather + lerp into the Pallas kernel
        # (PrefetchScalarGridSpec with prefetched source indices/weights) to save
        # one full activation HBM round-trip; for now use jax.image.resize, which
        # matches F.interpolate(bilinear, align_corners=False).
        b_, c_, _, _ = x.shape
        x = jax.image.resize(
            x, (b_, c_, target_shape[0], target_shape[1]),
            method="bilinear", antialias=False)

    B, C, H, W = x.shape
    K = kernel.shape[0]
    # Note: this fires *after* the optional resize, same as the PyTorch module.
    assert W == K, f"last input dim {W} must equal kernel_dim {K}"

    out_dtype = jnp.float32
    compute_dtype = jnp.bfloat16 if use_bf16 else jnp.float32
    itemsize = jnp.dtype(compute_dtype).itemsize

    M = B * C * H
    x_flat = x.reshape(M, K).astype(compute_dtype)

    # ---- Lane-dense packing: G independent rows per 128-wide lane group. ----
    if K < 128 and 128 % K == 0:
        G = 128 // K
    else:
        G = 1        # K >= 128 or non-divisor: keep exact column count (no pad
                     # -> no extra HBM traffic for this mem-bound kernel).
    K_packed = G * K

    M_grp = _round_up(M, G)
    if M_grp != M:
        x_flat = jnp.pad(x_flat, ((0, M_grp - M), (0, 0)))
    M_packed = M_grp // G
    x_packed = x_flat.reshape(M_packed, K_packed)

    w = kernel.astype(compute_dtype)
    if G > 1:
        # Block-diagonal weight: contraction over each K-wide group only; the
        # off-diagonal blocks are exactly zero -> no cross-group contamination.
        w = jnp.kron(jnp.eye(G, dtype=compute_dtype), w)

    # ---- Row-tile selection (per-generation VMEM safe, multi-step grid). ----
    row_align = 16 if compute_dtype == jnp.bfloat16 else 8
    m_pad0 = _round_up(M_packed, row_align)
    if m_pad0 <= _SLAB_ROWS:
        tm = m_pad0
    else:
        # Aim for >= 2 grid steps (v7x has 2 TensorCores) with tiles that are a
        # multiple of the slab size and capped at _MAX_TILE_ROWS.
        tm = min(_MAX_TILE_ROWS, _round_up(_cdiv(m_pad0, 2), _SLAB_ROWS))
    m_pad = _round_up(m_pad0, tm)
    if m_pad != M_packed:
        # Zero rows only produce relu(bias) garbage that is sliced off below.
        x_packed = jnp.pad(x_packed, ((0, m_pad - M_packed), (0, 0)))
    grid = (m_pad // tm,)

    # Explicit scoped-VMEM budget: 2 double-buffered input blocks + 2 output
    # blocks + the resident weight, with headroom; capped at 32 MiB which is
    # valid on v5e/v6e/v7x alike.
    block_in = tm * K_packed * itemsize
    block_out = tm * K_packed * jnp.dtype(out_dtype).itemsize
    weight_bytes = K_packed * K_packed * itemsize
    vmem_needed = 2 * block_in + 2 * block_out + weight_bytes
    vmem_limit = int(min(32 * 1024 * 1024, max(2 * vmem_needed, 4 * 1024 * 1024)))

    out_packed = pl.pallas_call(
        functools.partial(_cortical_kernel, num_layers=num_layers),
        out_shape=jax.ShapeDtypeStruct((m_pad, K_packed), out_dtype),
        grid_spec=pltpu.PrefetchScalarGridSpec(
            num_scalar_prefetch=0,
            grid=grid,
            in_specs=[
                pl.BlockSpec((tm, K_packed), lambda i: (i, 0)),           # x rows
                pl.BlockSpec((K_packed, K_packed), lambda i: (0, 0)),     # weight (fetched once)
                pl.BlockSpec(memory_space=pltpu.MemorySpace.SMEM),        # bias scalar
            ],
            out_specs=pl.BlockSpec((tm, K_packed), lambda i: (i, 0)),
        ),
        compiler_params=pltpu.CompilerParams(
            dimension_semantics=("parallel",),
            vmem_limit_bytes=vmem_limit),
    )(x_packed, w, jnp.asarray(bias, jnp.float32).reshape((1,)))

    out = out_packed[:M_packed].reshape(M_packed * G, K)[:M]
    return out.reshape(B, C, H, W).astype(out_dtype)


def cortical_column_reference(x, kernel, bias, *, num_layers=2, target_shape=None,
                              matmul_dtype=jnp.float32):
    """Pure-JAX reference mirroring the PyTorch module (optionally bf16 operands)."""
    if target_shape is not None:
        b_, c_, _, _ = x.shape
        x = jax.image.resize(
            x, (b_, c_, target_shape[0], target_shape[1]),
            method="bilinear", antialias=False)
    w = kernel.astype(matmul_dtype)
    h = x.astype(matmul_dtype)
    b = jnp.asarray(bias, jnp.float32)
    for _ in range(num_layers):
        y = jnp.matmul(h, w, preferred_element_type=jnp.float32) + b
        h = jnp.maximum(y, 0.0).astype(matmul_dtype)
    return h.astype(jnp.float32)


if __name__ == "__main__":
    key = jax.random.PRNGKey(0)
    k_x, k_w, k_b, k_x2 = jax.random.split(key, 4)

    # Small shapes consistent with the module: NCHW input, W == kernel_dim.
    B, C, H, W = 2, 4, 16, 16
    kernel_dim = W
    num_layers = 2

    x = jax.random.normal(k_x, (B, C, H, W), dtype=jnp.float32)
    kernel = jax.random.normal(k_w, (kernel_dim, kernel_dim), dtype=jnp.float32)
    bias = jax.random.normal(k_b, (1,), dtype=jnp.float32)

    # 1) f32 path, small shape.
    out = jax.block_until_ready(
        cortical_column_forward(x, kernel, bias, num_layers=num_layers))
    ref = cortical_column_reference(x, kernel, bias, num_layers=num_layers)
    assert out.shape == (B, C, H, W), out.shape
    assert jnp.allclose(out, ref, atol=1e-3, rtol=1e-3), \
        float(jnp.max(jnp.abs(out - ref)))

    # 2) bf16 HBM-traffic path (numerics-visible: compare to a bf16-operand ref).
    out_bf = jax.block_until_ready(
        cortical_column_forward(x, kernel, bias, num_layers=num_layers,
                                use_bf16=True))
    ref_bf = cortical_column_reference(x, kernel, bias, num_layers=num_layers,
                                       matmul_dtype=jnp.bfloat16)
    assert jnp.allclose(out_bf, ref_bf, atol=2e-2, rtol=2e-2), \
        float(jnp.max(jnp.abs(out_bf - ref_bf)))

    # 3) target_shape (bilinear resize) path.
    out_rs = jax.block_until_ready(
        cortical_column_forward(x, kernel, bias, num_layers=num_layers,
                                target_shape=(8, 16)))
    ref_rs = cortical_column_reference(x, kernel, bias, num_layers=num_layers,
                                       target_shape=(8, 16))
    assert out_rs.shape == (B, C, 8, 16), out_rs.shape
    assert jnp.allclose(out_rs, ref_rs, atol=1e-3, rtol=1e-3), \
        float(jnp.max(jnp.abs(out_rs - ref_rs)))

    # 4) Larger M to exercise the multi-step grid, lane packing and the
    #    in-kernel slab unroll (M_packed = 2048 -> tm = 1024, 2 grid steps,
    #    4 slabs per step).
    x2 = jax.random.normal(k_x2, (8, 8, 256, 16), dtype=jnp.float32)
    out2 = jax.block_until_ready(
        cortical_column_forward(x2, kernel, bias, num_layers=num_layers))
    ref2 = cortical_column_reference(x2, kernel, bias, num_layers=num_layers)
    assert jnp.allclose(out2, ref2, atol=1e-3, rtol=1e-3), \
        float(jnp.max(jnp.abs(out2 - ref2)))

    print("KERNEL_OK")
</pallas_src>

<mosaic_0001>
module attributes {stable_mosaic.version = 11 : i64} {
  func.func @_cortical_kernel(%arg0: i32, %arg1: memref<16x128xf32, #tpu.memory_space<vmem>>, %arg2: memref<128x128xf32, #tpu.memory_space<vmem>>, %arg3: memref<1xf32, #tpu.memory_space<smem>>, %arg4: memref<16x128xf32, #tpu.memory_space<vmem>>) attributes {dimension_semantics = [#tpu.dimension_semantics<parallel>], iteration_bounds = array<i64: 1>, scalar_prefetch = 0 : i64, scratch_operands = 0 : i64, tpu.core_type = #tpu.core_type<tc>, window_params = [{transform_indices = @transform_0, window_bounds = array<i64: 16, 128>}, {pipeline_mode = #tpu.pipeline_mode<synchronous>, transform_indices = @transform_1, window_bounds = array<i64: 128, 128>}, {transform_indices = @transform_2, window_bounds = array<i64: 1>}, {transform_indices = @transform_3, window_bounds = array<i64: 16, 128>}]} {
    %c0 = arith.constant 0 : index
    %c0_0 = arith.constant 0 : index
    %0 = vector.load %arg2[%c0, %c0_0] : memref<128x128xf32, #tpu.memory_space<vmem>>, vector<128x128xf32>
    %c0_1 = arith.constant 0 : index
    %1 = memref.load %arg3[%c0_1] : memref<1xf32, #tpu.memory_space<smem>>
    %c0_2 = arith.constant 0 : index
    %c0_3 = arith.constant 0 : index
    %2 = vector.load %arg1[%c0_2, %c0_3] : memref<16x128xf32, #tpu.memory_space<vmem>>, vector<16x128xf32>
    %cst = arith.constant dense<0.000000e+00> : vector<16x128xf32>
    %3 = tpu.matmul %2, %0, %cst {dimension_numbers = #tpu.dot_dimension_numbers<[1], [0], [0], [1], [0, 0, 1, 1], [], []>} : vector<16x128xf32>, vector<128x128xf32>, vector<16x128xf32> -> vector<16x128xf32>
    %4 = vector.broadcast %1 : f32 to vector<16x128xf32>
    %5 = arith.addf %3, %4 : vector<16x128xf32>
    %cst_4 = arith.constant 0.000000e+00 : f32
    %6 = vector.broadcast %cst_4 : f32 to vector<16x128xf32>
    %7 = arith.maximumf %5, %6 : vector<16x128xf32>
    %cst_5 = arith.constant dense<0.000000e+00> : vector<16x128xf32>
    %8 = tpu.matmul %7, %0, %cst_5 {dimension_numbers = #tpu.dot_dimension_numbers<[1], [0], [0], [1], [0, 0, 1, 1], [], []>} : vector<16x128xf32>, vector<128x128xf32>, vector<16x128xf32> -> vector<16x128xf32>
    %9 = vector.broadcast %1 : f32 to vector<16x128xf32>
    %10 = arith.addf %8, %9 : vector<16x128xf32>
    %cst_6 = arith.constant 0.000000e+00 : f32
    %11 = vector.broadcast %cst_6 : f32 to vector<16x128xf32>
    %12 = arith.maximumf %10, %11 : vector<16x128xf32>
    %c0_7 = arith.constant 0 : index
    %c0_8 = arith.constant 0 : index
    %13 = vector.load %arg4[%c0_7, %c0_8] : memref<16x128xf32, #tpu.memory_space<vmem>>, vector<16x128xf32>
    tpu.vector_store %arg4[%c0_7, %c0_8], %12 {strides = array<i32>} : memref<16x128xf32, #tpu.memory_space<vmem>>, vector<16x128xf32>,
    return
  }
  func.func @transform_0(%arg0: i32) -> (i32, i32) {
    %c0_i32 = arith.constant 0 : i32
    %c0_i32_0 = arith.constant 0 : i32
    return %arg0, %c0_i32 : i32, i32
  }
  func.func @transform_1(%arg0: i32) -> (i32, i32) {
    %c0_i32 = arith.constant 0 : i32
    %c0_i32_0 = arith.constant 0 : i32
    %c0_i32_1 = arith.constant 0 : i32
    return %c0_i32, %c0_i32_0 : i32, i32
  }
  func.func @transform_2(%arg0: i32) -> i32 {
    %c0_i32 = arith.constant 0 : i32
    %c0_i32_0 = arith.constant 0 : i32
    return %c0_i32 : i32
  }
  func.func @transform_3(%arg0: i32) -> (i32, i32) {
    %c0_i32 = arith.constant 0 : i32
    %c0_i32_0 = arith.constant 0 : i32
    return %arg0, %c0_i32 : i32, i32
  }
}

</mosaic_0001>

<llo_original>
// kernel: tpu_custom_call.1
$region0: #{tpu_custom_call.1}
  #allocation0 [shape = 'u32[]', space=smem, size = 0x4, offset = 0x4, fixed_abs, tag = 'smem constant byte address 0x4 - core index']
  #allocation1 [shape = 'u32[144,128]{1,0:T(1,128)}', space=vmem, size = 0x12000, scoped, tag = 'internal scratch']
  #allocation2 [shape = 'f32[1]{0:T(128)S(6)}', space=smem, size = 0x200, scoped, tag = 'scoped memory for tpu_custom_call.1']
  %s0 = inlined_call_operand.hbm [shape: f32[16,128], index: 0, kind: input, shape index: {}]
  %s1 = inlined_call_operand.hbm [shape: f32[128,128], index: 1, kind: input, shape index: {}]
  %s2 = inlined_call_operand.<no memory space> [shape: f32[1], index: 2, kind: input, shape index: {}]
  %s3 = inlined_call_operand.hbm [shape: f32[16,128], index: 3, kind: output, shape index: {}]
  %s4 = sld [smem:[#allocation0]]
  $region30: #{tpu_custom_call.1} parent=0
    _
  %s6 = ssub.s32 1, %s4
  %s7 = scalar_select 0, %s6, %s4
  %8 = sst [smem:[#allocation2]] %s2
  $region1: #{tpu_custom_call.1} parent=0
    #allocation3 [shape = 'u8[8192]{0}', space=vmem, size = 0x2000, scoped, tag = 'input window, operand 0, single buffered']
    #allocation4 [shape = 's32[1]{0}', space=sflag, size = 0x4, scoped, tag = 'scoped memory for tpu_custom_call.1']
    #allocation5 [shape = 's32[1]{0}', space=sflag, size = 0x4, scoped, tag = 'scoped memory for tpu_custom_call.1']
    #allocation6 [shape = 'u8[65536]{0}', space=vmem, size = 0x10000, scoped, tag = 'input window, operand 1, single buffered']
    #allocation7 [shape = 's32[1]{0}', space=sflag, size = 0x4, scoped, tag = 'scoped memory for tpu_custom_call.1']
    #allocation8 [shape = 'u8[8192]{0}', space=vmem, size = 0x2000, scoped, tag = 'output window, operand 0, single buffered']
    %9 = vsyncpa [#allocation4], 0
    %10 = vsyncpa [#allocation7], 0
    %11 = vsyncpa [#allocation5], 0
    // Predicated region
    $region2: #{tpu_custom_call.1} parent=1 // pred_check
      _
    $region3: #{tpu_custom_call.1} parent=1 // pred_check_branch
      %13 = sbr.rel (0) target = $region5
    $region4: #{tpu_custom_call.1} parent=1 // pred_region
      %s15 = ssub.s32 256, 256
      %16 = vsyncadd [#allocation4], %s15
      %s17 = sshll.u32 [#allocation3], 4
      %s18 = int_to_ptr.vmem [resolvable:$true] %s17
      %23 = dma.hbm_to_vmem [thread:$0]  %s0, 256, %s18, [#allocation4], 128, 128, 8
    $region5: #{tpu_custom_call.1} parent=1 // pred_fallthru
      _
    // Predicated region
    $region6: #{tpu_custom_call.1} parent=1 // pred_check
      _
    $region7: #{tpu_custom_call.1} parent=1 // pred_check_branch
      %25 = sbr.rel (0) target = $region9
    $region8: #{tpu_custom_call.1} parent=1 // pred_region
      %s27 = ssub.s32 2048, 2048
      %28 = vsyncadd [#allocation7], %s27
      %s29 = sshll.u32 [#allocation6], 4
      %s30 = int_to_ptr.vmem [resolvable:$true] %s29
      %35 = dma.hbm_to_vmem [thread:$0]  %s1, 2048, %s30, [#allocation7], 128, 128, 8
    $region9: #{tpu_custom_call.1} parent=1 // pred_fallthru
      _
    // Predicated region
    $region10: #{tpu_custom_call.1} parent=1 // pred_check
      _
    $region11: #{tpu_custom_call.1} parent=1 // pred_check_branch
      %37 = sbr.rel (0) target = $region13
    $region12: #{tpu_custom_call.1} parent=1 // pred_region
      _
    $region13: #{tpu_custom_call.1} parent=1 // pred_fallthru
      _
    // Predicated region
    $region14: #{tpu_custom_call.1} parent=1 // pred_check
      _
    $region15: #{tpu_custom_call.1} parent=1 // pred_check_branch
      %39 = sbr.rel (0) target = $region17
    $region16: #{tpu_custom_call.1} parent=1 // pred_region
      %40 = dma.done [#allocation4], 256
    $region17: #{tpu_custom_call.1} parent=1 // pred_fallthru
      _
    // Predicated region
    $region18: #{tpu_custom_call.1} parent=1 // pred_check
      _
    $region19: #{tpu_custom_call.1} parent=1 // pred_check_branch
      %42 = sbr.rel (0) target = $region21
    $region20: #{tpu_custom_call.1} parent=1 // pred_region
      %43 = dma.done [#allocation7], 2048
    $region21: #{tpu_custom_call.1} parent=1 // pred_fallthru
      _
    %v44 = vld [vmem:[#allocation6] sm:$0xff]
    %v45 = vld [vmem:[#allocation6 + $0x8] sm:$0xff]
    %v46 = vld [vmem:[#allocation6 + $0x10] sm:$0xff]
    %v47 = vld [vmem:[#allocation6 + $0x18] sm:$0xff]
    %v48 = vld [vmem:[#allocation6 + $0x20] sm:$0xff]
    %v49 = vld [vmem:[#allocation6 + $0x28] sm:$0xff]
    %v50 = vld [vmem:[#allocation6 + $0x30] sm:$0xff]
    %v51 = vld [vmem:[#allocation6 + $0x38] sm:$0xff]
    %v52 = vld [vmem:[#allocation6 + $0x40] sm:$0xff]
    %v53 = vld [vmem:[#allocation6 + $0x48] sm:$0xff]
    %v54 = vld [vmem:[#allocation6 + $0x50] sm:$0xff]
    %v55 = vld [vmem:[#allocation6 + $0x58] sm:$0xff]
    %v56 = vld [vmem:[#allocation6 + $0x60] sm:$0xff]
    %v57 = vld [vmem:[#allocation6 + $0x68] sm:$0xff]
    %v58 = vld [vmem:[#allocation6 + $0x70] sm:$0xff]
    %v59 = vld [vmem:[#allocation6 + $0x78] sm:$0xff]
    %s60 = sld [smem:[#allocation2]]
    %v61 = vld [vmem:[#allocation3] sm:$0xff]
    %v62 = vld [vmem:[#allocation3 + $0x8] sm:$0xff]
    %v63 = vstv %s60
    %64 = vmatprep.subr.mxu0 0.0
    %65 = vmatpush1.msra.mxu0 %v59
    %66 = vmatprep.subr.mxu0 0.0
    %67 = vmatpush1.msra.mxu0 %v58
    %68 = vmatprep.subr.mxu0 0.0
    %69 = vmatpush1.msra.mxu0 %v57
    %70 = vmatprep.subr.mxu0 0.0
    %71 = vmatpush1.msra.mxu0 %v56
    %72 = vmatprep.subr.mxu0 0.0
    %73 = vmatpush1.msra.mxu0 %v55
    %74 = vmatprep.subr.mxu0 0.0
    %75 = vmatpush1.msra.mxu0 %v54
    %76 = vmatprep.subr.mxu0 0.0
    %77 = vmatpush1.msra.mxu0 %v53
    %78 = vmatprep.subr.mxu0 0.0
    %79 = vmatpush1.msra.mxu0 %v52
    %80 = vmatprep.subr.mxu0 0.0
    %81 = vmatpush1.msra.mxu0 %v51
    %82 = vmatprep.subr.mxu0 0.0
    %83 = vmatpush1.msra.mxu0 %v50
    %84 = vmatprep.subr.mxu0 0.0
    %85 = vmatpush1.msra.mxu0 %v49
    %86 = vmatprep.subr.mxu0 0.0
    %87 = vmatpush1.msra.mxu0 %v48
    %88 = vmatprep.subr.mxu0 0.0
    %89 = vmatpush1.msra.mxu0 %v47
    %90 = vmatprep.subr.mxu0 0.0
    %91 = vmatpush1.msra.mxu0 %v46
    %92 = vmatprep.subr.mxu0 0.0
    %93 = vmatpush1.msra.mxu0 %v45
    %94 = vmatprep.subr.mxu0 0.0
    %95 = vmatpush1.msra.mxu0 %v44
    %96 = vmatprep.subr.mxu0 0.0
    %97 = vmatpush2.msra.mxu0 0.0
    %98 = vmatprep.subr.mxu0 0.0
    %99 = vmatpush2.msra.mxu0 0.0
    %100 = vmatprep.subr.mxu0 0.0
    %101 = vmatpush2.msra.mxu0 0.0
    %102 = vmatprep.subr.mxu0 0.0
    %103 = vmatpush2.msra.mxu0 0.0
    %104 = vmatprep.subr.mxu0 0.0
    %105 = vmatpush2.msra.mxu0 0.0
    %106 = vmatprep.subr.mxu0 0.0
    %107 = vmatpush2.msra.mxu0 0.0
    %108 = vmatprep.subr.mxu0 0.0
    %109 = vmatpush2.msra.mxu0 0.0
    %110 = vmatprep.subr.mxu0 0.0
    %111 = vmatpush2.msra.mxu0 0.0
    %112 = vmatprep.subr.mxu0 0.0
    %113 = vmatpush2.msra.mxu0 0.0
    %114 = vmatprep.subr.mxu0 0.0
    %115 = vmatpush2.msra.mxu0 0.0
    %116 = vmatprep.subr.mxu0 0.0
    %117 = vmatpush2.msra.mxu0 0.0
    %118 = vmatprep.subr.mxu0 0.0
    %119 = vmatpush2.msra.mxu0 0.0
    %120 = vmatprep.subr.mxu0 0.0
    %121 = vmatpush2.msra.mxu0 0.0
    %122 = vmatprep.subr.mxu0 0.0
    %123 = vmatpush2.msra.mxu0 0.0
    %124 = vmatprep.subr.mxu0 0.0
    %125 = vmatpush2.msra.mxu0 0.0
    %126 = vmatprep.subr.mxu0 0.0
    %127 = vmatpush2.msra.mxu0 0.0
    %128 = vmatprep.mubr.f32.mxu0 0.0
    %129 = vmatmul.mubr.f32.gmra.mxu0 %v61
    %v130 = vpop.f32.mrf.mxu0
    %v131 = vadd.f32 %v63, %v130
    %v132 = vpop.f32.mrf.mxu0
    %133 = vmatprep.mubr.f32.mxu0 0.0
    %134 = vmatmul.mubr.f32.gmra.mxu0 %v62
    %v135 = vpop.f32.mrf.mxu0
    %v136 = vadd.f32 %v63, %v135
    %v137 = vpop.f32.mrf.mxu0
    %138 = vdwg.mxu0
    %v139 = vmax.f32 %v131, 0.0
    %v140 = vmax.f32 %v136, 0.0
    %141 = vmatprep.subr.mxu0 0.0
    %142 = vmatpush1.msra.mxu0 %v59
    %143 = vmatprep.subr.mxu0 0.0
    %144 = vmatpush1.msra.mxu0 %v58
    %145 = vmatprep.subr.mxu0 0.0
    %146 = vmatpush1.msra.mxu0 %v57
    %147 = vmatprep.subr.mxu0 0.0
    %148 = vmatpush1.msra.mxu0 %v56
    %149 = vmatprep.subr.mxu0 0.0
    %150 = vmatpush1.msra.mxu0 %v55
    %151 = vmatprep.subr.mxu0 0.0
    %152 = vmatpush1.msra.mxu0 %v54
    %153 = vmatprep.subr.mxu0 0.0
    %154 = vmatpush1.msra.mxu0 %v53
    %155 = vmatprep.subr.mxu0 0.0
    %156 = vmatpush1.msra.mxu0 %v52
    %157 = vmatprep.subr.mxu0 0.0
    %158 = vmatpush1.msra.mxu0 %v51
    %159 = vmatprep.subr.mxu0 0.0
    %160 = vmatpush1.msra.mxu0 %v50
    %161 = vmatprep.subr.mxu0 0.0
    %162 = vmatpush1.msra.mxu0 %v49
    %163 = vmatprep.subr.mxu0 0.0
    %164 = vmatpush1.msra.mxu0 %v48
    %165 = vmatprep.subr.mxu0 0.0
    %166 = vmatpush1.msra.mxu0 %v47
    %167 = vmatprep.subr.mxu0 0.0
    %168 = vmatpush1.msra.mxu0 %v46
    %169 = vmatprep.subr.mxu0 0.0
    %170 = vmatpush1.msra.mxu0 %v45
    %171 = vmatprep.subr.mxu0 0.0
    %172 = vmatpush1.msra.mxu0 %v44
    %173 = vmatprep.subr.mxu0 0.0
    %174 = vmatpush2.msra.mxu0 0.0
    %175 = vmatprep.subr.mxu0 0.0
    %176 = vmatpush2.msra.mxu0 0.0
    %177 = vmatprep.subr.mxu0 0.0
    %178 = vmatpush2.msra.mxu0 0.0
    %179 = vmatprep.subr.mxu0 0.0
    %180 = vmatpush2.msra.mxu0 0.0
    %181 = vmatprep.subr.mxu0 0.0
    %182 = vmatpush2.msra.mxu0 0.0
    %183 = vmatprep.subr.mxu0 0.0
    %184 = vmatpush2.msra.mxu0 0.0
    %185 = vmatprep.subr.mxu0 0.0
    %186 = vmatpush2.msra.mxu0 0.0
    %187 = vmatprep.subr.mxu0 0.0
    %188 = vmatpush2.msra.mxu0 0.0
    %189 = vmatprep.subr.mxu0 0.0
    %190 = vmatpush2.msra.mxu0 0.0
    %191 = vmatprep.subr.mxu0 0.0
    %192 = vmatpush2.msra.mxu0 0.0
    %193 = vmatprep.subr.mxu0 0.0
    %194 = vmatpush2.msra.mxu0 0.0
    %195 = vmatprep.subr.mxu0 0.0
    %196 = vmatpush2.msra.mxu0 0.0
    %197 = vmatprep.subr.mxu0 0.0
    %198 = vmatpush2.msra.mxu0 0.0
    %199 = vmatprep.subr.mxu0 0.0
    %200 = vmatpush2.msra.mxu0 0.0
    %201 = vmatprep.subr.mxu0 0.0
    %202 = vmatpush2.msra.mxu0 0.0
    %203 = vmatprep.subr.mxu0 0.0
    %204 = vmatpush2.msra.mxu0 0.0
    %205 = vmatprep.mubr.f32.mxu0 0.0
    %206 = vmatmul.mubr.f32.gmra.mxu0 %v139
    %v207 = vpop.f32.mrf.mxu0
    %v208 = vadd.f32 %v63, %v207
    %v209 = vpop.f32.mrf.mxu0
    %210 = vmatprep.mubr.f32.mxu0 0.0
    %211 = vmatmul.mubr.f32.gmra.mxu0 %v140
    %v212 = vpop.f32.mrf.mxu0
    %v213 = vadd.f32 %v63, %v212
    %v214 = vpop.f32.mrf.mxu0
    %215 = vdwg.mxu0
    %v216 = vmax.f32 %v208, 0.0
    %v217 = vmax.f32 %v213, 0.0
    %218 = vst [vmem:[#allocation8] sm:$0xff] %v216
    %219 = vst [vmem:[#allocation8 + $0x8] sm:$0xff] %v217
    // Predicated region
    $region22: #{tpu_custom_call.1} parent=1 // pred_check
      _
    $region23: #{tpu_custom_call.1} parent=1 // pred_check_branch
      %221 = sbr.rel (0) target = $region25
    $region24: #{tpu_custom_call.1} parent=1 // pred_region
      %s223 = ssub.s32 256, 256
      %224 = vsyncadd [#allocation5], %s223
      %s225 = sshll.u32 [#allocation8], 4
      %s226 = int_to_ptr.vmem [resolvable:$true] %s225
      %231 = dma.vmem_to_hbm [thread:$0]  %s226, 256, %s3, [#allocation5], 128, 128, 8
    $region25: #{tpu_custom_call.1} parent=1 // pred_fallthru
      _
    // Predicated region
    $region26: #{tpu_custom_call.1} parent=1 // pred_check
      _
    $region27: #{tpu_custom_call.1} parent=1 // pred_check_branch
      %233 = sbr.rel (0) target = $region29
    $region28: #{tpu_custom_call.1} parent=1 // pred_region
      %234 = dma.done [#allocation5], 256
    $region29: #{tpu_custom_call.1} parent=1 // pred_fallthru
      _
    %235 = vsyncpa [#allocation4], 1
    %236 = vsyncpa [#allocation7], 1
    %237 = vsyncpa [#allocation5], 1

</llo_original>
